<compile_context>
chip_gen: v7x
topology: tpu7x:2x2x1
jax: 0.10.0
libtpu: 0.0.40
codegen_flags: <defaults>
</compile_context>

<pallas_src>
import functools

import jax
import jax.numpy as jnp
from jax.experimental import pallas as pl
from jax.experimental.pallas import tpu as pltpu


def _actor_kernel(pack, num_actions, x_ref, w1_ref, b1_ref, w2_ref, b2_ref,
                  w3_ref, b3_ref, out_ref):
    """One batch tile: 3 MXU matmuls + bias/ReLU (VPU) + segmented softmax.

    x_ref:   (tile, pack*obs)          bf16  -- `pack` original rows per lane-row
    w*_ref:  block-diagonal weights,   bf16  (resident in VMEM, constant index_map)
    b*_ref:  lane-tiled biases,        f32
    out_ref: (tile, pack*num_actions)  f32 probabilities
    """
    x = x_ref[...]
    h1 = jnp.dot(x, w1_ref[...], preferred_element_type=jnp.float32) + b1_ref[...]
    h1 = jnp.maximum(h1, 0.0).astype(jnp.bfloat16)
    h2 = jnp.dot(h1, w2_ref[...], preferred_element_type=jnp.float32) + b2_ref[...]
    h2 = jnp.maximum(h2, 0.0).astype(jnp.bfloat16)
    logits = (jnp.dot(h2, w3_ref[...], preferred_element_type=jnp.float32)
              + b3_ref[...])                      # (tile, pack*num_actions) f32

    # Segmented, numerically-stable softmax: each contiguous group of
    # `num_actions` lanes is one original batch row.  Only full-width masked
    # reduces (no sub-tile lane slicing) -- tiny VPU/XLU filler under the MXU
    # work -- and an EXACT division so probabilities sum to 1 at f32 precision.
    lane = jax.lax.broadcasted_iota(jnp.int32, logits.shape, 1)
    masks = [(lane >= j * num_actions) & (lane < (j + 1) * num_actions)
             for j in range(pack)]
    m = jnp.zeros_like(logits)
    for mask in masks:
        mj = jnp.max(jnp.where(mask, logits, -jnp.inf), axis=-1, keepdims=True)
        m = jnp.where(mask, mj, m)
    e = jnp.exp(logits - m)
    denom = jnp.ones_like(logits)
    for mask in masks:
        sj = jnp.sum(jnp.where(mask, e, 0.0), axis=-1, keepdims=True)
        denom = jnp.where(mask, sj, denom)
    out_ref[...] = (e / denom).astype(out_ref.dtype)


def _block_diag(w, pack):
    """(k, n) -> (pack*k, pack*n) with `w` repeated on the diagonal blocks."""
    k, n = w.shape
    out = jnp.zeros((pack * k, pack * n), w.dtype)
    for j in range(pack):
        out = out.at[j * k:(j + 1) * k, j * n:(j + 1) * n].set(w)
    return out


def actor_forward(x, params):
    """x: (B, obs_size) float32. params: dict w1,b1,w2,b2,w3,b3 ((in,out) / (1,out))."""
    B, obs = x.shape
    hidden = params["w1"].shape[1]
    acts = params["w3"].shape[1]

    # Pack `pack` batch rows per 128-lane row so the streamed activations are
    # lane-dense (obs = hidden = 32 -> pack = 4 -> 128 lanes).
    pack = max(1, 128 // max(obs, hidden))

    # Packed-row tile: multiple of 16 sublanes (safe for the bf16 input tile),
    # ~half the packed rows per step so grid >= 2 whenever there is enough
    # work (v7x megacore), capped at 256 packed rows (= 1024 original rows).
    bp = pl.cdiv(B, pack)                     # packed rows needed
    tp = min(256, max(16, pl.cdiv(pl.cdiv(bp, 2), 16) * 16))
    grid_n = pl.cdiv(bp, tp)
    bp_pad = grid_n * tp
    b_pad = bp_pad * pack

    # Zero-pad the batch to a whole number of tiles (padded rows produce valid
    # but discarded probabilities), pack rows into lanes (free row-major
    # reshape), cast to bf16 for the MXU / halved DMA traffic.
    x_pad = jnp.pad(x, ((0, b_pad - B), (0, 0)))
    x_packed = x_pad.reshape(bp_pad, pack * obs).astype(jnp.bfloat16)

    # Block-diagonal weights / lane-tiled biases: built once (tiny), kept
    # resident in VMEM across grid steps via constant index_maps.
    w1 = _block_diag(params["w1"], pack).astype(jnp.bfloat16)
    w2 = _block_diag(params["w2"], pack).astype(jnp.bfloat16)
    w3 = _block_diag(params["w3"], pack).astype(jnp.bfloat16)
    b1 = jnp.tile(params["b1"], (1, pack))
    b2 = jnp.tile(params["b2"], (1, pack))
    b3 = jnp.tile(params["b3"], (1, pack))

    def const_spec(shape):
        return pl.BlockSpec(shape, lambda i: (0, 0))

    kernel = functools.partial(_actor_kernel, pack, acts)

    out_packed = pl.pallas_call(
        kernel,
        out_shape=jax.ShapeDtypeStruct((bp_pad, pack * acts), jnp.float32),
        grid=(grid_n,),
        in_specs=[
            pl.BlockSpec((tp, pack * obs), lambda i: (i, 0)),
            const_spec((pack * obs, pack * hidden)),
            const_spec((1, pack * hidden)),
            const_spec((pack * hidden, pack * hidden)),
            const_spec((1, pack * hidden)),
            const_spec((pack * hidden, pack * acts)),
            const_spec((1, pack * acts)),
        ],
        out_specs=pl.BlockSpec((tp, pack * acts), lambda i: (i, 0)),
        compiler_params=pltpu.CompilerParams(
            # Independent batch tiles -> megacore-shardable on v7x (2 TCs).
            dimension_semantics=("parallel",),
            # Tiny footprint (<1 MiB); explicit limit stays well under v7x's
            # 64 MiB physical VMEM.
            vmem_limit_bytes=32 * 1024 * 1024,
        ),
    )(x_packed, w1, b1, w2, b2, w3, b3)

    # (bp_pad, pack*acts) -> (b_pad, acts) is a free row-major reshape.
    return out_packed.reshape(b_pad, acts)[:B]


def init_params(key, obs_size, hidden_size, num_actions):
    # Deterministic synthetic init (PyTorch nn.Linear-style uniform bounds),
    # weights stored as (in, out), biases as (1, out).
    ks = jax.random.split(key, 6)

    def linear(kw, kb, fan_in, fan_out):
        bound = 1.0 / jnp.sqrt(float(fan_in))
        w = jax.random.uniform(kw, (fan_in, fan_out), jnp.float32, -bound, bound)
        b = jax.random.uniform(kb, (1, fan_out), jnp.float32, -bound, bound)
        return w, b

    w1, b1 = linear(ks[0], ks[1], obs_size, hidden_size)
    w2, b2 = linear(ks[2], ks[3], hidden_size, hidden_size)
    w3, b3 = linear(ks[4], ks[5], hidden_size, num_actions)
    return {"w1": w1, "b1": b1, "w2": w2, "b2": b2, "w3": w3, "b3": b3}


def _ref(x, p):
    h1 = jnp.maximum(x @ p["w1"] + p["b1"], 0.0)
    h2 = jnp.maximum(h1 @ p["w2"] + p["b2"], 0.0)
    logits = h2 @ p["w3"] + p["b3"]
    return jax.nn.softmax(logits, axis=-1)


if __name__ == "__main__":
    key = jax.random.PRNGKey(0)
    k_x, k_p, k_x2, k_x3 = jax.random.split(key, 4)

    obs_size, hidden_size, num_actions = 32, 32, 8
    params = init_params(k_p, obs_size, hidden_size, num_actions)
    fwd = jax.jit(actor_forward)

    def check(x):
        probs = jax.block_until_ready(fwd(x, params))
        expected = _ref(x, params)
        assert probs.shape == (x.shape[0], num_actions)
        # bf16 matmuls vs f32 reference -> loose per-element tolerance...
        assert jnp.allclose(probs, expected, atol=2e-2, rtol=2e-2)
        # ...but exact f32 normalization -> tight sum-to-1.
        assert jnp.allclose(jnp.sum(probs, axis=-1), 1.0, atol=1e-5)

    # Small batch consistent with the module's typical RL usage (single tile;
    # launch-overhead dominated).
    check(jax.random.normal(k_x, (8, obs_size), jnp.float32))

    # Larger batch: packed lane-dense tiles, grid = 2 (pipelined x DMA, v7x
    # megacore on the parallel batch axis).
    check(jax.random.normal(k_x2, (2048, obs_size), jnp.float32))

    # Ragged batch exercising the wrapper-side padding path (no full-batch
    # fallback tile).
    check(jax.random.normal(k_x3, (100, obs_size), jnp.float32))

    print("KERNEL_OK")
</pallas_src>

<mosaic_0001>
module attributes {stable_mosaic.version = 11 : i64} {
  func.func @_actor_kernel(%arg0: i32, %arg1: memref<16x128xbf16, #tpu.memory_space<vmem>>, %arg2: memref<128x128xbf16, #tpu.memory_space<vmem>>, %arg3: memref<1x128xf32, #tpu.memory_space<vmem>>, %arg4: memref<128x128xbf16, #tpu.memory_space<vmem>>, %arg5: memref<1x128xf32, #tpu.memory_space<vmem>>, %arg6: memref<128x32xbf16, #tpu.memory_space<vmem>>, %arg7: memref<1x32xf32, #tpu.memory_space<vmem>>, %arg8: memref<16x32xf32, #tpu.memory_space<vmem>>) attributes {dimension_semantics = [#tpu.dimension_semantics<parallel>], iteration_bounds = array<i64: 1>, scalar_prefetch = 0 : i64, scratch_operands = 0 : i64, tpu.core_type = #tpu.core_type<tc>, window_params = [{transform_indices = @transform_0, window_bounds = array<i64: 16, 128>}, {pipeline_mode = #tpu.pipeline_mode<synchronous>, transform_indices = @transform_1, window_bounds = array<i64: 128, 128>}, {pipeline_mode = #tpu.pipeline_mode<synchronous>, transform_indices = @transform_2, window_bounds = array<i64: 1, 128>}, {pipeline_mode = #tpu.pipeline_mode<synchronous>, transform_indices = @transform_3, window_bounds = array<i64: 128, 128>}, {pipeline_mode = #tpu.pipeline_mode<synchronous>, transform_indices = @transform_4, window_bounds = array<i64: 1, 128>}, {pipeline_mode = #tpu.pipeline_mode<synchronous>, transform_indices = @transform_5, window_bounds = array<i64: 128, 32>}, {pipeline_mode = #tpu.pipeline_mode<synchronous>, transform_indices = @transform_6, window_bounds = array<i64: 1, 32>}, {transform_indices = @transform_7, window_bounds = array<i64: 16, 32>}]} {
    %c0 = arith.constant 0 : index
    %c0_0 = arith.constant 0 : index
    %0 = vector.load %arg1[%c0, %c0_0] : memref<16x128xbf16, #tpu.memory_space<vmem>>, vector<16x128xbf16>
    %c0_1 = arith.constant 0 : index
    %c0_2 = arith.constant 0 : index
    %1 = vector.load %arg2[%c0_1, %c0_2] : memref<128x128xbf16, #tpu.memory_space<vmem>>, vector<128x128xbf16>
    %cst = arith.constant dense<0.000000e+00> : vector<16x128xf32>
    %2 = tpu.matmul %0, %1, %cst {dimension_numbers = #tpu.dot_dimension_numbers<[1], [0], [0], [1], [0, 0, 1, 1], [], []>} : vector<16x128xbf16>, vector<128x128xbf16>, vector<16x128xf32> -> vector<16x128xf32>
    %c0_3 = arith.constant 0 : index
    %c0_4 = arith.constant 0 : index
    %3 = vector.load %arg3[%c0_3, %c0_4] : memref<1x128xf32, #tpu.memory_space<vmem>>, vector<1x128xf32>
    %4 = vector.broadcast %3 : vector<1x128xf32> to vector<16x128xf32>
    %5 = arith.addf %2, %4 : vector<16x128xf32>
    %cst_5 = arith.constant 0.000000e+00 : f32
    %6 = vector.broadcast %cst_5 : f32 to vector<16x128xf32>
    %7 = arith.maximumf %5, %6 : vector<16x128xf32>
    %8 = arith.truncf %7 : vector<16x128xf32> to vector<16x128xbf16>
    %c0_6 = arith.constant 0 : index
    %c0_7 = arith.constant 0 : index
    %9 = vector.load %arg4[%c0_6, %c0_7] : memref<128x128xbf16, #tpu.memory_space<vmem>>, vector<128x128xbf16>
    %cst_8 = arith.constant dense<0.000000e+00> : vector<16x128xf32>
    %10 = tpu.matmul %8, %9, %cst_8 {dimension_numbers = #tpu.dot_dimension_numbers<[1], [0], [0], [1], [0, 0, 1, 1], [], []>} : vector<16x128xbf16>, vector<128x128xbf16>, vector<16x128xf32> -> vector<16x128xf32>
    %c0_9 = arith.constant 0 : index
    %c0_10 = arith.constant 0 : index
    %11 = vector.load %arg5[%c0_9, %c0_10] : memref<1x128xf32, #tpu.memory_space<vmem>>, vector<1x128xf32>
    %12 = vector.broadcast %11 : vector<1x128xf32> to vector<16x128xf32>
    %13 = arith.addf %10, %12 : vector<16x128xf32>
    %cst_11 = arith.constant 0.000000e+00 : f32
    %14 = vector.broadcast %cst_11 : f32 to vector<16x128xf32>
    %15 = arith.maximumf %13, %14 : vector<16x128xf32>
    %16 = arith.truncf %15 : vector<16x128xf32> to vector<16x128xbf16>
    %c0_12 = arith.constant 0 : index
    %c0_13 = arith.constant 0 : index
    %17 = vector.load %arg6[%c0_12, %c0_13] : memref<128x32xbf16, #tpu.memory_space<vmem>>, vector<128x32xbf16>
    %cst_14 = arith.constant dense<0.000000e+00> : vector<16x32xf32>
    %18 = tpu.matmul %16, %17, %cst_14 {dimension_numbers = #tpu.dot_dimension_numbers<[1], [0], [0], [1], [0, 0, 1, 1], [], []>} : vector<16x128xbf16>, vector<128x32xbf16>, vector<16x32xf32> -> vector<16x32xf32>
    %c0_15 = arith.constant 0 : index
    %c0_16 = arith.constant 0 : index
    %19 = vector.load %arg7[%c0_15, %c0_16] : memref<1x32xf32, #tpu.memory_space<vmem>>, vector<1x32xf32>
    %20 = vector.broadcast %19 : vector<1x32xf32> to vector<16x32xf32>
    %21 = arith.addf %18, %20 : vector<16x32xf32>
    %22 = tpu.iota {dimensions = array<i32: 1>} : vector<16x32xi32>
    %c0_i32 = arith.constant 0 : i32
    %23 = vector.broadcast %c0_i32 : i32 to vector<16x32xi32>
    %24 = arith.cmpi sge, %22, %23 : vector<16x32xi32>
    %c8_i32 = arith.constant 8 : i32
    %25 = vector.broadcast %c8_i32 : i32 to vector<16x32xi32>
    %26 = arith.cmpi slt, %22, %25 : vector<16x32xi32>
    %27 = arith.andi %24, %26 : vector<16x32xi1>
    %c8_i32_17 = arith.constant 8 : i32
    %28 = vector.broadcast %c8_i32_17 : i32 to vector<16x32xi32>
    %29 = arith.cmpi sge, %22, %28 : vector<16x32xi32>
    %c16_i32 = arith.constant 16 : i32
    %30 = vector.broadcast %c16_i32 : i32 to vector<16x32xi32>
    %31 = arith.cmpi slt, %22, %30 : vector<16x32xi32>
    %32 = arith.andi %29, %31 : vector<16x32xi1>
    %c16_i32_18 = arith.constant 16 : i32
    %33 = vector.broadcast %c16_i32_18 : i32 to vector<16x32xi32>
    %34 = arith.cmpi sge, %22, %33 : vector<16x32xi32>
    %c24_i32 = arith.constant 24 : i32
    %35 = vector.broadcast %c24_i32 : i32 to vector<16x32xi32>
    %36 = arith.cmpi slt, %22, %35 : vector<16x32xi32>
    %37 = arith.andi %34, %36 : vector<16x32xi1>
    %c24_i32_19 = arith.constant 24 : i32
    %38 = vector.broadcast %c24_i32_19 : i32 to vector<16x32xi32>
    %39 = arith.cmpi sge, %22, %38 : vector<16x32xi32>
    %c32_i32 = arith.constant 32 : i32
    %40 = vector.broadcast %c32_i32 : i32 to vector<16x32xi32>
    %41 = arith.cmpi slt, %22, %40 : vector<16x32xi32>
    %42 = arith.andi %39, %41 : vector<16x32xi1>
    %cst_20 = arith.constant 0.000000e+00 : f32
    %43 = vector.broadcast %cst_20 : f32 to vector<16x32xf32>
    %cst_21 = arith.constant 0xFF800000 : f32
    %44 = vector.broadcast %cst_21 : f32 to vector<16x32xf32>
    %45 = arith.select %27, %21, %44 : vector<16x32xi1>, vector<16x32xf32>
    %cst_22 = arith.constant dense<0xFF800000> : vector<16xf32>
    %46 = vector.multi_reduction <maximumf>, %45, %cst_22 [1] : vector<16x32xf32> to vector<16xf32>
    %47 = vector.shape_cast %46 : vector<16xf32> to vector<16x1xf32>
    %48 = vector.shape_cast %47 : vector<16x1xf32> to vector<16x1xf32>
    %49 = vector.broadcast %48 : vector<16x1xf32> to vector<16x32xf32>
    %50 = arith.select %27, %49, %43 : vector<16x32xi1>, vector<16x32xf32>
    %cst_23 = arith.constant 0xFF800000 : f32
    %51 = vector.broadcast %cst_23 : f32 to vector<16x32xf32>
    %52 = arith.select %32, %21, %51 : vector<16x32xi1>, vector<16x32xf32>
    %cst_24 = arith.constant dense<0xFF800000> : vector<16xf32>
    %53 = vector.multi_reduction <maximumf>, %52, %cst_24 [1] : vector<16x32xf32> to vector<16xf32>
    %54 = vector.shape_cast %53 : vector<16xf32> to vector<16x1xf32>
    %55 = vector.shape_cast %54 : vector<16x1xf32> to vector<16x1xf32>
    %56 = vector.broadcast %55 : vector<16x1xf32> to vector<16x32xf32>
    %57 = arith.select %32, %56, %50 : vector<16x32xi1>, vector<16x32xf32>
    %cst_25 = arith.constant 0xFF800000 : f32
    %58 = vector.broadcast %cst_25 : f32 to vector<16x32xf32>
    %59 = arith.select %37, %21, %58 : vector<16x32xi1>, vector<16x32xf32>
    %cst_26 = arith.constant dense<0xFF800000> : vector<16xf32>
    %60 = vector.multi_reduction <maximumf>, %59, %cst_26 [1] : vector<16x32xf32> to vector<16xf32>
    %61 = vector.shape_cast %60 : vector<16xf32> to vector<16x1xf32>
    %62 = vector.shape_cast %61 : vector<16x1xf32> to vector<16x1xf32>
    %63 = vector.broadcast %62 : vector<16x1xf32> to vector<16x32xf32>
    %64 = arith.select %37, %63, %57 : vector<16x32xi1>, vector<16x32xf32>
    %cst_27 = arith.constant 0xFF800000 : f32
    %65 = vector.broadcast %cst_27 : f32 to vector<16x32xf32>
    %66 = arith.select %42, %21, %65 : vector<16x32xi1>, vector<16x32xf32>
    %cst_28 = arith.constant dense<0xFF800000> : vector<16xf32>
    %67 = vector.multi_reduction <maximumf>, %66, %cst_28 [1] : vector<16x32xf32> to vector<16xf32>
    %68 = vector.shape_cast %67 : vector<16xf32> to vector<16x1xf32>
    %69 = vector.shape_cast %68 : vector<16x1xf32> to vector<16x1xf32>
    %70 = vector.broadcast %69 : vector<16x1xf32> to vector<16x32xf32>
    %71 = arith.select %42, %70, %64 : vector<16x32xi1>, vector<16x32xf32>
    %72 = arith.subf %21, %71 : vector<16x32xf32>
    %73 = math.exp %72 : vector<16x32xf32>
    %cst_29 = arith.constant 1.000000e+00 : f32
    %74 = vector.broadcast %cst_29 : f32 to vector<16x32xf32>
    %cst_30 = arith.constant 0.000000e+00 : f32
    %75 = vector.broadcast %cst_30 : f32 to vector<16x32xf32>
    %76 = arith.select %27, %73, %75 : vector<16x32xi1>, vector<16x32xf32>
    %cst_31 = arith.constant dense<0.000000e+00> : vector<16xf32>
    %77 = vector.multi_reduction <add>, %76, %cst_31 [1] : vector<16x32xf32> to vector<16xf32>
    %78 = vector.shape_cast %77 : vector<16xf32> to vector<16x1xf32>
    %79 = vector.shape_cast %78 : vector<16x1xf32> to vector<16x1xf32>
    %80 = vector.broadcast %79 : vector<16x1xf32> to vector<16x32xf32>
    %81 = arith.select %27, %80, %74 : vector<16x32xi1>, vector<16x32xf32>
    %cst_32 = arith.constant 0.000000e+00 : f32
    %82 = vector.broadcast %cst_32 : f32 to vector<16x32xf32>
    %83 = arith.select %32, %73, %82 : vector<16x32xi1>, vector<16x32xf32>
    %cst_33 = arith.constant dense<0.000000e+00> : vector<16xf32>
    %84 = vector.multi_reduction <add>, %83, %cst_33 [1] : vector<16x32xf32> to vector<16xf32>
    %85 = vector.shape_cast %84 : vector<16xf32> to vector<16x1xf32>
    %86 = vector.shape_cast %85 : vector<16x1xf32> to vector<16x1xf32>
    %87 = vector.broadcast %86 : vector<16x1xf32> to vector<16x32xf32>
    %88 = arith.select %32, %87, %81 : vector<16x32xi1>, vector<16x32xf32>
    %cst_34 = arith.constant 0.000000e+00 : f32
    %89 = vector.broadcast %cst_34 : f32 to vector<16x32xf32>
    %90 = arith.select %37, %73, %89 : vector<16x32xi1>, vector<16x32xf32>
    %cst_35 = arith.constant dense<0.000000e+00> : vector<16xf32>
    %91 = vector.multi_reduction <add>, %90, %cst_35 [1] : vector<16x32xf32> to vector<16xf32>
    %92 = vector.shape_cast %91 : vector<16xf32> to vector<16x1xf32>
    %93 = vector.shape_cast %92 : vector<16x1xf32> to vector<16x1xf32>
    %94 = vector.broadcast %93 : vector<16x1xf32> to vector<16x32xf32>
    %95 = arith.select %37, %94, %88 : vector<16x32xi1>, vector<16x32xf32>
    %cst_36 = arith.constant 0.000000e+00 : f32
    %96 = vector.broadcast %cst_36 : f32 to vector<16x32xf32>
    %97 = arith.select %42, %73, %96 : vector<16x32xi1>, vector<16x32xf32>
    %cst_37 = arith.constant dense<0.000000e+00> : vector<16xf32>
    %98 = vector.multi_reduction <add>, %97, %cst_37 [1] : vector<16x32xf32> to vector<16xf32>
    %99 = vector.shape_cast %98 : vector<16xf32> to vector<16x1xf32>
    %100 = vector.shape_cast %99 : vector<16x1xf32> to vector<16x1xf32>
    %101 = vector.broadcast %100 : vector<16x1xf32> to vector<16x32xf32>
    %102 = arith.select %42, %101, %95 : vector<16x32xi1>, vector<16x32xf32>
    %103 = arith.divf %73, %102 : vector<16x32xf32>
    %c0_38 = arith.constant 0 : index
    %c0_39 = arith.constant 0 : index
    %104 = vector.load %arg8[%c0_38, %c0_39] : memref<16x32xf32, #tpu.memory_space<vmem>>, vector<16x32xf32>
    tpu.vector_store %arg8[%c0_38, %c0_39], %103 {strides = array<i32>} : memref<16x32xf32, #tpu.memory_space<vmem>>, vector<16x32xf32>,
    return
  }
  func.func @transform_0(%arg0: i32) -> (i32, i32) {
    %c0_i32 = arith.constant 0 : i32
    %c0_i32_0 = arith.constant 0 : i32
    return %arg0, %c0_i32 : i32, i32
  }
  func.func @transform_1(%arg0: i32) -> (i32, i32) {
    %c0_i32 = arith.constant 0 : i32
    %c0_i32_0 = arith.constant 0 : i32
    %c0_i32_1 = arith.constant 0 : i32
    return %c0_i32, %c0_i32_0 : i32, i32
  }
  func.func @transform_2(%arg0: i32) -> (i32, i32) {
    %c0_i32 = arith.constant 0 : i32
    %c0_i32_0 = arith.constant 0 : i32
    %c0_i32_1 = arith.constant 0 : i32
    return %c0_i32, %c0_i32_0 : i32, i32
  }
  func.func @transform_3(%arg0: i32) -> (i32, i32) {
    %c0_i32 = arith.constant 0 : i32
    %c0_i32_0 = arith.constant 0 : i32
    %c0_i32_1 = arith.constant 0 : i32
    return %c0_i32, %c0_i32_0 : i32, i32
  }
  func.func @transform_4(%arg0: i32) -> (i32, i32) {
    %c0_i32 = arith.constant 0 : i32
    %c0_i32_0 = arith.constant 0 : i32
    %c0_i32_1 = arith.constant 0 : i32
    return %c0_i32, %c0_i32_0 : i32, i32
  }
  func.func @transform_5(%arg0: i32) -> (i32, i32) {
    %c0_i32 = arith.constant 0 : i32
    %c0_i32_0 = arith.constant 0 : i32
    %c0_i32_1 = arith.constant 0 : i32
    return %c0_i32, %c0_i32_0 : i32, i32
  }
  func.func @transform_6(%arg0: i32) -> (i32, i32) {
    %c0_i32 = arith.constant 0 : i32
    %c0_i32_0 = arith.constant 0 : i32
    %c0_i32_1 = arith.constant 0 : i32
    return %c0_i32, %c0_i32_0 : i32, i32
  }
  func.func @transform_7(%arg0: i32) -> (i32, i32) {
    %c0_i32 = arith.constant 0 : i32
    %c0_i32_0 = arith.constant 0 : i32
    return %arg0, %c0_i32 : i32, i32
  }
}

</mosaic_0001>

<llo_original>
// kernel: actor_forward.1
$region0: #{actor_forward.1}
  #allocation0 [shape = 'u32[]', space=smem, size = 0x4, offset = 0x4, fixed_abs, tag = 'smem constant byte address 0x4 - core index']
  #allocation1 [shape = 'u32[144,128]{1,0:T(1,128)}', space=vmem, size = 0x12000, scoped, tag = 'internal scratch']
  %s0 = inlined_call_operand.vmem [shape: bf16[16,128], index: 0, kind: input, shape index: {}]
  %s1 = inlined_call_operand.vmem [shape: bf16[128,128], index: 1, kind: input, shape index: {}]
  %s2 = inlined_call_operand.vmem [shape: f32[1,128], index: 2, kind: input, shape index: {}]
  %s3 = inlined_call_operand.vmem [shape: bf16[128,128], index: 3, kind: input, shape index: {}]
  %s4 = inlined_call_operand.vmem [shape: f32[1,128], index: 4, kind: input, shape index: {}]
  %s5 = inlined_call_operand.vmem [shape: bf16[128,32], index: 5, kind: input, shape index: {}]
  %s6 = inlined_call_operand.vmem [shape: f32[1,32], index: 6, kind: input, shape index: {}]
  %s7 = inlined_call_operand.vmem [shape: f32[16,32], index: 7, kind: output, shape index: {}]
  %s8 = sld [smem:[#allocation0]]
  $region38: #{actor_forward.1} parent=0
    _
  %s10 = ssub.s32 1, %s8
  %s11 = scalar_select 0, %s10, %s8
  // Predicated region
  $region2: #{actor_forward.1} parent=0 // pred_check
    _
  $region3: #{actor_forward.1} parent=0 // pred_check_branch
    %13 = sbr.rel (0) target = $region5
  $region4: #{actor_forward.1} parent=0 // pred_region
    _
  $region5: #{actor_forward.1} parent=0 // pred_fallthru
    _
  // Predicated region
  $region6: #{actor_forward.1} parent=0 // pred_check
    _
  $region7: #{actor_forward.1} parent=0 // pred_check_branch
    %15 = sbr.rel (0) target = $region9
  $region8: #{actor_forward.1} parent=0 // pred_region
    _
  $region9: #{actor_forward.1} parent=0 // pred_fallthru
    _
  // Predicated region
  $region10: #{actor_forward.1} parent=0 // pred_check
    _
  $region11: #{actor_forward.1} parent=0 // pred_check_branch
    %17 = sbr.rel (0) target = $region13
  $region12: #{actor_forward.1} parent=0 // pred_region
    _
  $region13: #{actor_forward.1} parent=0 // pred_fallthru
    _
  // Predicated region
  $region14: #{actor_forward.1} parent=0 // pred_check
    _
  $region15: #{actor_forward.1} parent=0 // pred_check_branch
    %19 = sbr.rel (0) target = $region17
  $region16: #{actor_forward.1} parent=0 // pred_region
    _
  $region17: #{actor_forward.1} parent=0 // pred_fallthru
    _
  // Predicated region
  $region18: #{actor_forward.1} parent=0 // pred_check
    _
  $region19: #{actor_forward.1} parent=0 // pred_check_branch
    %21 = sbr.rel (0) target = $region21
  $region20: #{actor_forward.1} parent=0 // pred_region
    _
  $region21: #{actor_forward.1} parent=0 // pred_fallthru
    _
  // Predicated region
  $region22: #{actor_forward.1} parent=0 // pred_check
    _
  $region23: #{actor_forward.1} parent=0 // pred_check_branch
    %23 = sbr.rel (0) target = $region25
  $region24: #{actor_forward.1} parent=0 // pred_region
    _
  $region25: #{actor_forward.1} parent=0 // pred_fallthru
    _
  // Predicated region
  $region26: #{actor_forward.1} parent=0 // pred_check
    _
  $region27: #{actor_forward.1} parent=0 // pred_check_branch
    %25 = sbr.rel (0) target = $region29
  $region28: #{actor_forward.1} parent=0 // pred_region
    _
  $region29: #{actor_forward.1} parent=0 // pred_fallthru
    _
  %v27 = vld [vmem:[%s0] sm:$0xf]
  %v28 = vld [vmem:[%s0 + $0x4] sm:$0xf]
  %v29 = vld [vmem:[%s1] sm:$0xf]
  %v30 = vld [vmem:[%s1 + $0x4] sm:$0xf]
  %v31 = vld [vmem:[%s1 + $0x8] sm:$0xf]
  %v32 = vld [vmem:[%s1 + $0xc] sm:$0xf]
  %v33 = vld [vmem:[%s1 + $0x10] sm:$0xf]
  %v34 = vld [vmem:[%s1 + $0x14] sm:$0xf]
  %v35 = vld [vmem:[%s1 + $0x18] sm:$0xf]
  %v36 = vld [vmem:[%s1 + $0x1c] sm:$0xf]
  %v37 = vld [vmem:[%s1 + $0x20] sm:$0xf]
  %v38 = vld [vmem:[%s1 + $0x24] sm:$0xf]
  %v39 = vld [vmem:[%s1 + $0x28] sm:$0xf]
  %v40 = vld [vmem:[%s1 + $0x2c] sm:$0xf]
  %v41 = vld [vmem:[%s1 + $0x30] sm:$0xf]
  %v42 = vld [vmem:[%s1 + $0x34] sm:$0xf]
  %v43 = vld [vmem:[%s1 + $0x38] sm:$0xf]
  %v44 = vld [vmem:[%s1 + $0x3c] sm:$0xf]
  %v45 = vld [vmem:[%s2] sm:$0x1]
  %v47 = vlaneseq
  %v48 = vshrl.u32 %v47, 7
  %v49 = vsub.s32 0, %v48
  %v50 = vrot.slane %v45, %v49
  %v54 = vunpack.c.l.b16 %v27
  %v55 = vunpack.c.l.b16 %v28
  %v56 = vpack.c.b16 %v55, %v54
  %v74 = vunpack.c.l.b16 %v29
  %v75 = vunpack.c.l.b16 %v30
  %v76 = vunpack.c.l.b16 %v31
  %v77 = vunpack.c.l.b16 %v32
  %v78 = vunpack.c.l.b16 %v33
  %v79 = vunpack.c.l.b16 %v34
  %v80 = vunpack.c.l.b16 %v35
  %v81 = vunpack.c.l.b16 %v36
  %v82 = vunpack.c.l.b16 %v37
  %v83 = vunpack.c.l.b16 %v38
  %v84 = vunpack.c.l.b16 %v39
  %v85 = vunpack.c.l.b16 %v40
  %v86 = vunpack.c.l.b16 %v41
  %v87 = vunpack.c.l.b16 %v42
  %v88 = vunpack.c.l.b16 %v43
  %v89 = vunpack.c.l.b16 %v44
  %v90 = vpack.c.b16 %v75, %v74
  %v91 = vpack.c.b16 %v77, %v76
  %v92 = vpack.c.b16 %v79, %v78
  %v93 = vpack.c.b16 %v81, %v80
  %v94 = vpack.c.b16 %v83, %v82
  %v95 = vpack.c.b16 %v85, %v84
  %v96 = vpack.c.b16 %v87, %v86
  %v97 = vpack.c.b16 %v89, %v88
  %106 = vmatprep.subr.bf16.mxu0 0
  %107 = vmatpush1.bf16.msra.mxu0 %v90
  %108 = vmatprep.subr.bf16.mxu0 0
  %109 = vmatpush1.bf16.msra.mxu0 %v91
  %110 = vmatprep.subr.bf16.mxu0 0
  %111 = vmatpush1.bf16.msra.mxu0 %v92
  %112 = vmatprep.subr.bf16.mxu0 0
  %113 = vmatpush1.bf16.msra.mxu0 %v93
  %114 = vmatprep.subr.bf16.mxu0 0
  %115 = vmatpush1.bf16.msra.mxu0 %v94
  %116 = vmatprep.subr.bf16.mxu0 0
  %117 = vmatpush1.bf16.msra.mxu0 %v95
  %118 = vmatprep.subr.bf16.mxu0 0
  %119 = vmatpush1.bf16.msra.mxu0 %v96
  %120 = vmatprep.subr.bf16.mxu0 0
  %121 = vmatpush1.bf16.msra.mxu0 %v97
  %122 = vmatprep.subr.bf16.mxu0 0
  %123 = vmatpush1.bf16.msra.mxu0 0
  %124 = vmatprep.subr.bf16.mxu0 0
  %125 = vmatpush1.bf16.msra.mxu0 0
  %126 = vmatprep.subr.bf16.mxu0 0
  %127 = vmatpush1.bf16.msra.mxu0 0
  %128 = vmatprep.subr.bf16.mxu0 0
  %129 = vmatpush1.bf16.msra.mxu0 0
  %130 = vmatprep.subr.bf16.mxu0 0
  %131 = vmatpush1.bf16.msra.mxu0 0
  %132 = vmatprep.subr.bf16.mxu0 0
  %133 = vmatpush1.bf16.msra.mxu0 0
  %134 = vmatprep.subr.bf16.mxu0 0
  %135 = vmatpush1.bf16.msra.mxu0 0
  %136 = vmatprep.subr.bf16.mxu0 0
  %137 = vmatpush1.bf16.msra.mxu0 0
  %138 = vmatprep.mubr.bf16.mxu0 0
  %139 = vmatmul.mubr.bf16.gmra.mrb[0].mxu0 %v56
  %v140 = vpop.f32.mrb[0].mxu0
  %v141 = vadd.f32 %v50, %v140
  %v142 = vpop.f32.mrb[0].mxu0
  %v143 = vpop.f32.mrb[0].mxu0
  %v144 = vadd.f32 %v50, %v143
  %v145 = vpop.f32.mrb[0].mxu0
  %146 = vdwg.mxu0
  %v147 = vmax.f32 %v141, 0.0
  %v148 = vmax.f32 %v144, 0.0
  %v149 = vpack.c.bf16 %v148, %v147
  %v150 = vld [vmem:[%s3] sm:$0xf]
  %v151 = vld [vmem:[%s3 + $0x4] sm:$0xf]
  %v152 = vld [vmem:[%s3 + $0x8] sm:$0xf]
  %v153 = vld [vmem:[%s3 + $0xc] sm:$0xf]
  %v154 = vld [vmem:[%s3 + $0x10] sm:$0xf]
  %v155 = vld [vmem:[%s3 + $0x14] sm:$0xf]
  %v156 = vld [vmem:[%s3 + $0x18] sm:$0xf]
  %v157 = vld [vmem:[%s3 + $0x1c] sm:$0xf]
  %v158 = vld [vmem:[%s3 + $0x20] sm:$0xf]
  %v159 = vld [vmem:[%s3 + $0x24] sm:$0xf]
  %v160 = vld [vmem:[%s3 + $0x28] sm:$0xf]
  %v161 = vld [vmem:[%s3 + $0x2c] sm:$0xf]
  %v162 = vld [vmem:[%s3 + $0x30] sm:$0xf]
  %v163 = vld [vmem:[%s3 + $0x34] sm:$0xf]
  %v164 = vld [vmem:[%s3 + $0x38] sm:$0xf]
  %v165 = vld [vmem:[%s3 + $0x3c] sm:$0xf]
  %v166 = vld [vmem:[%s4] sm:$0x1]
  %v168 = vlaneseq
  %v169 = vshrl.u32 %v168, 7
  %v170 = vsub.s32 0, %v169
  %v171 = vrot.slane %v166, %v170
  %v189 = vunpack.c.l.b16 %v150
  %v190 = vunpack.c.l.b16 %v151
  %v191 = vunpack.c.l.b16 %v152
  %v192 = vunpack.c.l.b16 %v153
  %v193 = vunpack.c.l.b16 %v154
  %v194 = vunpack.c.l.b16 %v155
  %v195 = vunpack.c.l.b16 %v156
  %v196 = vunpack.c.l.b16 %v157
  %v197 = vunpack.c.l.b16 %v158
  %v198 = vunpack.c.l.b16 %v159
  %v199 = vunpack.c.l.b16 %v160
  %v200 = vunpack.c.l.b16 %v161
  %v201 = vunpack.c.l.b16 %v162
  %v202 = vunpack.c.l.b16 %v163
  %v203 = vunpack.c.l.b16 %v164
  %v204 = vunpack.c.l.b16 %v165
  %v205 = vpack.c.b16 %v190, %v189
  %v206 = vpack.c.b16 %v192, %v191
  %v207 = vpack.c.b16 %v194, %v193
  %v208 = vpack.c.b16 %v196, %v195
  %v209 = vpack.c.b16 %v198, %v197
  %v210 = vpack.c.b16 %v200, %v199
  %v211 = vpack.c.b16 %v202, %v201
  %v212 = vpack.c.b16 %v204, %v203
  %221 = vmatprep.subr.bf16.mxu0 0
  %222 = vmatpush1.bf16.msra.mxu0 %v205
  %223 = vmatprep.subr.bf16.mxu0 0
  %224 = vmatpush1.bf16.msra.mxu0 %v206
  %225 = vmatprep.subr.bf16.mxu0 0
  %226 = vmatpush1.bf16.msra.mxu0 %v207
  %227 = vmatprep.subr.bf16.mxu0 0
  %228 = vmatpush1.bf16.msra.mxu0 %v208
  %229 = vmatprep.subr.bf16.mxu0 0
  %230 = vmatpush1.bf16.msra.mxu0 %v209
  %231 = vmatprep.subr.bf16.mxu0 0
  %232 = vmatpush1.bf16.msra.mxu0 %v210
  %233 = vmatprep.subr.bf16.mxu0 0
  %234 = vmatpush1.bf16.msra.mxu0 %v211
  %235 = vmatprep.subr.bf16.mxu0 0
  %236 = vmatpush1.bf16.msra.mxu0 %v212
  %237 = vmatprep.subr.bf16.mxu0 0
  %238 = vmatpush1.bf16.msra.mxu0 0
  %239 = vmatprep.subr.bf16.mxu0 0
  %240 = vmatpush1.bf16.msra.mxu0 0
  %241 = vmatprep.subr.bf16.mxu0 0
  %242 = vmatpush1.bf16.msra.mxu0 0
  %243 = vmatprep.subr.bf16.mxu0 0
  %244 = vmatpush1.bf16.msra.mxu0 0
  %245 = vmatprep.subr.bf16.mxu0 0
  %246 = vmatpush1.bf16.msra.mxu0 0
  %247 = vmatprep.subr.bf16.mxu0 0
  %248 = vmatpush1.bf16.msra.mxu0 0
  %249 = vmatprep.subr.bf16.mxu0 0
  %250 = vmatpush1.bf16.msra.mxu0 0
  %251 = vmatprep.subr.bf16.mxu0 0
  %252 = vmatpush1.bf16.msra.mxu0 0
  %253 = vmatprep.mubr.bf16.mxu0 0
  %254 = vmatmul.mubr.bf16.gmra.mrb[0].mxu0 %v149
  %v255 = vpop.f32.mrb[0].mxu0
  %v256 = vadd.f32 %v171, %v255
  %v257 = vpop.f32.mrb[0].mxu0
  %v258 = vpop.f32.mrb[0].mxu0
  %v259 = vadd.f32 %v171, %v258
  %v260 = vpop.f32.mrb[0].mxu0
  %261 = vdwg.mxu0
  %v262 = vmax.f32 %v256, 0.0
  %v263 = vmax.f32 %v259, 0.0
  %v264 = vpack.c.bf16 %v263, %v262
  %v265 = vld [vmem:[%s5] sm:$0xf]
  %v266 = vld [vmem:[%s5 + $0x4] sm:$0xf]
  %v267 = vld [vmem:[%s5 + $0x8] sm:$0xf]
  %v268 = vld [vmem:[%s5 + $0xc] sm:$0xf]
  %v269 = vld [vmem:[%s5 + $0x10] sm:$0xf]
  %v270 = vld [vmem:[%s5 + $0x14] sm:$0xf]
  %v271 = vld [vmem:[%s5 + $0x18] sm:$0xf]
  %v272 = vld [vmem:[%s5 + $0x1c] sm:$0xf]
  %v273 = vld [vmem:[%s5 + $0x20] sm:$0xf]
  %v274 = vld [vmem:[%s5 + $0x24] sm:$0xf]
  %v275 = vld [vmem:[%s5 + $0x28] sm:$0xf]
  %v276 = vld [vmem:[%s5 + $0x2c] sm:$0xf]
  %v277 = vld [vmem:[%s5 + $0x30] sm:$0xf]
  %v278 = vld [vmem:[%s5 + $0x34] sm:$0xf]
  %v279 = vld [vmem:[%s5 + $0x38] sm:$0xf]
  %v280 = vld [vmem:[%s5 + $0x3c] sm:$0xf]
  %v281 = vld [vmem:[%s6] sm:$0x1]
  %v283 = vlaneseq
  %v284 = vshrl.u32 %v283, 7
  %v285 = vsub.s32 0, %v284
  %v286 = vrot.slane %v281, %v285
  %v304 = vunpack.c.l.b16 %v265
  %v305 = vunpack.c.l.b16 %v266
  %v306 = vunpack.c.l.b16 %v267
  %v307 = vunpack.c.l.b16 %v268
  %v308 = vunpack.c.l.b16 %v269
  %v309 = vunpack.c.l.b16 %v270
  %v310 = vunpack.c.l.b16 %v271
  %v311 = vunpack.c.l.b16 %v272
  %v312 = vunpack.c.l.b16 %v273
  %v313 = vunpack.c.l.b16 %v274
  %v314 = vunpack.c.l.b16 %v275
  %v315 = vunpack.c.l.b16 %v276
  %v316 = vunpack.c.l.b16 %v277
  %v317 = vunpack.c.l.b16 %v278
  %v318 = vunpack.c.l.b16 %v279
  %v319 = vunpack.c.l.b16 %v280
  %v320 = vpack.c.b16 %v305, %v304
  %v321 = vpack.c.b16 %v307, %v306
  %v322 = vpack.c.b16 %v309, %v308
  %v323 = vpack.c.b16 %v311, %v310
  %v324 = vpack.c.b16 %v313, %v312
  %v325 = vpack.c.b16 %v315, %v314
  %v326 = vpack.c.b16 %v317, %v316
  %v327 = vpack.c.b16 %v319, %v318
  %336 = vmatprep.subr.bf16.mxu0 0
  %337 = vmatpush1.bf16.msra.mxu0 %v320
  %338 = vmatprep.subr.bf16.mxu0 0
  %339 = vmatpush1.bf16.msra.mxu0 %v321
  %340 = vmatprep.subr.bf16.mxu0 0
  %341 = vmatpush1.bf16.msra.mxu0 %v322
  %342 = vmatprep.subr.bf16.mxu0 0
  %343 = vmatpush1.bf16.msra.mxu0 %v323
  %344 = vmatprep.subr.bf16.mxu0 0
  %345 = vmatpush1.bf16.msra.mxu0 %v324
  %346 = vmatprep.subr.bf16.mxu0 0
  %347 = vmatpush1.bf16.msra.mxu0 %v325
  %348 = vmatprep.subr.bf16.mxu0 0
  %349 = vmatpush1.bf16.msra.mxu0 %v326
  %350 = vmatprep.subr.bf16.mxu0 0
  %351 = vmatpush1.bf16.msra.mxu0 %v327
  %352 = vmatprep.subr.bf16.mxu0 0
  %353 = vmatpush1.bf16.msra.mxu0 0
  %354 = vmatprep.subr.bf16.mxu0 0
  %355 = vmatpush1.bf16.msra.mxu0 0
  %356 = vmatprep.subr.bf16.mxu0 0
  %357 = vmatpush1.bf16.msra.mxu0 0
  %358 = vmatprep.subr.bf16.mxu0 0
  %359 = vmatpush1.bf16.msra.mxu0 0
  %360 = vmatprep.subr.bf16.mxu0 0
  %361 = vmatpush1.bf16.msra.mxu0 0
  %362 = vmatprep.subr.bf16.mxu0 0
  %363 = vmatpush1.bf16.msra.mxu0 0
  %364 = vmatprep.subr.bf16.mxu0 0
  %365 = vmatpush1.bf16.msra.mxu0 0
  %366 = vmatprep.subr.bf16.mxu0 0
  %367 = vmatpush1.bf16.msra.mxu0 0
  %368 = vmatprep.mubr.bf16.mxu0 0
  %369 = vmatmul.mubr.bf16.gmra.mrb[0].mxu0 %v264
  %v370 = vpop.f32.mrb[0].mxu0
  %v371 = vadd.f32 %v286, %v370
  %v372 = vpop.f32.mrb[0].mxu0
  %v373 = vpop.f32.mrb[0].mxu0
  %v374 = vadd.f32 %v286, %v373
  %v375 = vpop.f32.mrb[0].mxu0
  %376 = vdwg.mxu0
  %v377 = vlaneseq
  %v378 = vand.u32 %v377, 127
  %vm379 = vcmp.ge.s32.totalorder %v378, 0
  %vm380 = vcmp.lt.s32.totalorder %v378, 8
  %vm381 = vmand %vm379, %vm380
  %vm382 = vcmp.ge.s32.totalorder %v378, 8
  %vm383 = vcmp.lt.s32.totalorder %v378, 16
  %vm384 = vmand %vm382, %vm383
  %vm385 = vcmp.ge.s32.totalorder %v378, 16
  %vm386 = vcmp.lt.s32.totalorder %v378, 24
  %vm387 = vmand %vm385, %vm386
  %vm388 = vcmp.ge.s32.totalorder %v378, 24
  %vm389 = vcmp.lt.s32.totalorder %v378, 32
  %vm390 = vmand %vm388, %vm389
  %v391 = vsel %vm381, %v371, -inf
  %v392 = vsel %vm381, %v374, -inf
  %vm393 = vcmask 261120
  %v394 = vsel %vm393, %v391, -inf
  %395 = vmax.xlane.f32.xlu0 %v394
  %v396 = vpop.xlane.xlu0 %395
  %v397 = vsel %vm393, %v392, -inf
  %398 = vmax.xlane.f32.xlu0 %v397
  %v399 = vpop.xlane.xlu0 %398
  %v400 = vsel %vm381, %v396, 0.0
  %v401 = vsel %vm381, %v399, 0.0
  %v402 = vsel %vm384, %v371, -inf
  %v403 = vsel %vm384, %v374, -inf
  %v404 = vsel %vm393, %v402, -inf
  %405 = vmax.xlane.f32.xlu0 %v404
  %v406 = vpop.xlane.xlu0 %405
  %v407 = vsel %vm393, %v403, -inf
  %408 = vmax.xlane.f32.xlu0 %v407
  %v409 = vpop.xlane.xlu0 %408
  %v410 = vsel %vm384, %v406, %v400
  %v411 = vsel %vm384, %v409, %v401
  %v412 = vsel %vm387, %v371, -inf
  %v413 = vsel %vm387, %v374, -inf
  %v414 = vsel %vm393, %v412, -inf
  %415 = vmax.xlane.f32.xlu0 %v414
  %v416 = vpop.xlane.xlu0 %415
  %v417 = vsel %vm393, %v413, -inf
  %418 = vmax.xlane.f32.xlu0 %v417
  %v419 = vpop.xlane.xlu0 %418
  %v420 = vsel %vm387, %v416, %v410
  %v421 = vsel %vm387, %v419, %v411
  %v422 = vsel %vm390, %v371, -inf
  %v423 = vsel %vm390, %v374, -inf
  %v424 = vsel %vm393, %v422, -inf
  %425 = vmax.xlane.f32.xlu0 %v424
  %v426 = vpop.xlane.xlu0 %425
  %v427 = vsel %vm393, %v423, -inf
  %428 = vmax.xlane.f32.xlu0 %v427
  %v429 = vpop.xlane.xlu0 %428
  %v430 = vsel %vm390, %v426, %v420
  %v431 = vsel %vm390, %v429, %v421
  %v432 = vsub.f32 %v371, %v430
  %v433 = vsub.f32 %v374, %v431
  %v434 = vmul.f32 %v432, 1.442695
  %v435 = vpow.pop %v434
  %v436 = vmul.f32 %v433, 1.442695
  %v437 = vpow.pop %v436
  %v438 = vsel %vm381, %v435, 0.0
  %v439 = vsel %vm381, %v437, 0.0
  %v440 = vsel %vm393, %v438, 0.0
  %441 = vadd.xlane.f32.xlu0 %v440
  %v442 = vpop.xlane.xlu0 %441
  %v443 = vsel %vm393, %v439, 0.0
  %444 = vadd.xlane.f32.xlu0 %v443
  %v445 = vpop.xlane.xlu0 %444
  %v446 = vsel %vm381, %v442, 1.0
  %v447 = vsel %vm381, %v445, 1.0
  %v448 = vsel %vm384, %v435, 0.0
  %v449 = vsel %vm384, %v437, 0.0
  %v450 = vsel %vm393, %v448, 0.0
  %451 = vadd.xlane.f32.xlu0 %v450
  %v452 = vpop.xlane.xlu0 %451
  %v453 = vsel %vm393, %v449, 0.0
  %454 = vadd.xlane.f32.xlu0 %v453
  %v455 = vpop.xlane.xlu0 %454
  %v456 = vsel %vm384, %v452, %v446
  %v457 = vsel %vm384, %v455, %v447
  %v458 = vsel %vm387, %v435, 0.0
  %v459 = vsel %vm387, %v437, 0.0
  %v460 = vsel %vm393, %v458, 0.0
  %461 = vadd.xlane.f32.xlu0 %v460
  %v462 = vpop.xlane.xlu0 %461
  %v463 = vsel %vm393, %v459, 0.0
  %464 = vadd.xlane.f32.xlu0 %v463
  %v465 = vpop.xlane.xlu0 %464
  %v466 = vsel %vm387, %v462, %v456
  %v467 = vsel %vm387, %v465, %v457
  %v468 = vsel %vm390, %v435, 0.0
  %v469 = vsel %vm390, %v437, 0.0
  %v470 = vsel %vm393, %v468, 0.0
  %471 = vadd.xlane.f32.xlu0 %v470
  %v472 = vpop.xlane.xlu0 %471
  %v473 = vsel %vm393, %v469, 0.0
  %474 = vadd.xlane.f32.xlu0 %v473
  %v475 = vpop.xlane.xlu0 %474
  %v476 = vsel %vm390, %v472, %v466
  %v477 = vsel %vm390, %v475, %v467
  %v478 = vrcp.pop %v476
  %v479 = vmul.f32 %v435, %v478
  %v480 = vrcp.pop %v477
  %v481 = vmul.f32 %v437, %v480
  %482 = vst.msk [vmem:[%s7] sm:$0xff] %vm393, %v479
  %483 = vst.msk [vmem:[%s7 + $0x8] sm:$0xff] %vm393, %v481
  // Predicated region
  $region30: #{actor_forward.1} parent=0 // pred_check
    _
  $region31: #{actor_forward.1} parent=0 // pred_check_branch
    %485 = sbr.rel (0) target = $region33
  $region32: #{actor_forward.1} parent=0 // pred_region
    _
  $region33: #{actor_forward.1} parent=0 // pred_fallthru
    _
  // Predicated region
  $region34: #{actor_forward.1} parent=0 // pred_check
    _
  $region35: #{actor_forward.1} parent=0 // pred_check_branch
    %487 = sbr.rel (0) target = $region37
  $region36: #{actor_forward.1} parent=0 // pred_region
    _
  $region37: #{actor_forward.1} parent=0 // pred_fallthru
    _

</llo_original>
